<compile_context>
chip_gen: v7x
topology: tpu7x:2x2x1
jax: 0.10.0
libtpu: 0.0.40
codegen_flags: <defaults>
</compile_context>

<pallas_src>
import jax
import jax.numpy as jnp
from jax.experimental import pallas as pl
from jax.experimental.pallas import tpu as pltpu

NUM_EMBEDDINGS = 50  # nn.Embedding(50, embed_dim)


def position_encoding_pallas(x, col_embed, row_embed):
    """Returns pos of shape (B, 2*E, H, W) matching the PyTorch module."""
    B, _, H, W = x.shape
    E = col_embed.shape[1]
    n_dim = 2 * E
    assert row_embed.shape == (NUM_EMBEDDINGS, E)
    assert col_embed.shape == (NUM_EMBEDDINGS, E)
    assert H <= NUM_EMBEDDINGS and W <= NUM_EMBEDDINGS

    # One combined parameter input -> a single input DMA instead of two.
    tables = jnp.stack([col_embed, row_embed], axis=0)  # (2, 50, E)

    def kernel(tab_ref, o_ref):
        col = tab_ref[0, :W, :]  # (W, E) = col_embed(arange(W))
        row = tab_ref[1, :H, :]  # (H, E) = row_embed(arange(H))

        # Build channel-last, spatially flattened slabs.  The reshape merges
        # (H, W) into the sublane axis while keeping E on the lane axis, which
        # is a layout-trivial relabel on TPU (no lane-merging reshape).
        x_hw = jnp.broadcast_to(col[None, :, :], (H, W, E)).reshape(H * W, E)
        y_hw = jnp.broadcast_to(row[:, None, :], (H, W, E)).reshape(H * W, E)

        # Transpose to channel-first (cheap XLU work) and store lane-dense:
        # lane index p = h*W + w, so o[:E, p] = col[w] and o[E:, p] = row[h].
        o_ref[:E, :] = x_hw.T  # (E, H*W)
        o_ref[E:, :] = y_hw.T  # (E, H*W)

    pos_flat = pl.pallas_call(
        kernel,
        out_shape=jax.ShapeDtypeStruct((n_dim, H * W), col_embed.dtype),
        in_specs=[pl.BlockSpec(memory_space=pltpu.MemorySpace.VMEM)],
        out_specs=pl.BlockSpec(memory_space=pltpu.MemorySpace.VMEM),
    )(tables)

    # Wrapper-side layout plumbing: row-major reshape (free) and batch
    # broadcast (avoids writing the identical slab B times; fuses downstream).
    pos = pos_flat.reshape(n_dim, H, W)
    return jnp.broadcast_to(pos[None], (B, n_dim, H, W))


def position_encoding_ref(x, col_embed, row_embed):
    """Pure-JAX reference mirroring the PyTorch forward."""
    B, _, H, W = x.shape
    x_embed = col_embed[jnp.arange(W)]  # (W, E)
    y_embed = row_embed[jnp.arange(H)]  # (H, E)
    pos = jnp.concatenate(
        [jnp.broadcast_to(x_embed[None, :, :], (H, W, x_embed.shape[-1])),
         jnp.broadcast_to(y_embed[:, None, :], (H, W, y_embed.shape[-1]))],
        axis=-1)                                  # (H, W, 2E)
    pos = jnp.transpose(pos, (2, 0, 1))[None]     # (1, 2E, H, W)
    return jnp.broadcast_to(pos, (B,) + pos.shape[1:])


if __name__ == "__main__":
    key = jax.random.PRNGKey(0)
    k_x, k_row, k_col = jax.random.split(key, 3)

    # Small shapes consistent with the module: n_dim=32 -> embed_dim=16.
    B, C, H, W = 2, 4, 16, 16
    n_dim = 32
    E = n_dim // 2

    x = jax.random.normal(k_x, (B, C, H, W), dtype=jnp.float32)
    # nn.init.uniform_ -> U[0, 1)
    row_embed = jax.random.uniform(k_row, (NUM_EMBEDDINGS, E), dtype=jnp.float32)
    col_embed = jax.random.uniform(k_col, (NUM_EMBEDDINGS, E), dtype=jnp.float32)

    pos = position_encoding_pallas(x, col_embed, row_embed)
    pos = jax.block_until_ready(pos)

    ref = position_encoding_ref(x, col_embed, row_embed)
    assert pos.shape == (B, n_dim, H, W)
    assert jnp.allclose(pos, ref), "Pallas output does not match reference"

    print("KERNEL_OK")
</pallas_src>

<mosaic_0001>
module attributes {stable_mosaic.version = 11 : i64} {
  func.func @kernel(%arg0: memref<2x50x16xf32, #tpu.memory_space<vmem>>, %arg1: memref<32x256xf32, #tpu.memory_space<vmem>>) attributes {dimension_semantics = [], scalar_prefetch = 0 : i64, scratch_operands = 0 : i64, tpu.core_type = #tpu.core_type<tc>} {
    %c0 = arith.constant 0 : index
    %c0_0 = arith.constant 0 : index
    %c0_1 = arith.constant 0 : index
    %0 = vector.load %arg0[%c0, %c0_0, %c0_1] : memref<2x50x16xf32, #tpu.memory_space<vmem>>, vector<1x16x16xf32>
    %1 = vector.shape_cast %0 : vector<1x16x16xf32> to vector<16x16xf32>
    %c1 = arith.constant 1 : index
    %c0_2 = arith.constant 0 : index
    %c0_3 = arith.constant 0 : index
    %2 = vector.load %arg0[%c1, %c0_2, %c0_3] : memref<2x50x16xf32, #tpu.memory_space<vmem>>, vector<1x16x16xf32>
    %3 = vector.shape_cast %2 : vector<1x16x16xf32> to vector<16x16xf32>
    %4 = vector.shape_cast %1 : vector<16x16xf32> to vector<1x16x16xf32>
    %5 = vector.shape_cast %4 : vector<1x16x16xf32> to vector<1x16x16xf32>
    %6 = vector.broadcast %5 : vector<1x16x16xf32> to vector<16x16x16xf32>
    %7 = vector.shape_cast %6 : vector<16x16x16xf32> to vector<256x16xf32>
    %8 = vector.shape_cast %3 : vector<16x16xf32> to vector<16x1x16xf32>
    %9 = vector.shape_cast %8 : vector<16x1x16xf32> to vector<16x1x16xf32>
    %10 = vector.broadcast %9 : vector<16x1x16xf32> to vector<16x16x16xf32>
    %11 = vector.shape_cast %10 : vector<16x16x16xf32> to vector<256x16xf32>
    %12 = tpu.transpose %7, [1, 0] : vector<256x16xf32> -> vector<16x256xf32>
    %c0_4 = arith.constant 0 : index
    %c0_5 = arith.constant 0 : index
    %13 = vector.load %arg1[%c0_4, %c0_5] : memref<32x256xf32, #tpu.memory_space<vmem>>, vector<16x256xf32>
    tpu.vector_store %arg1[%c0_4, %c0_5], %12 {strides = array<i32>} : memref<32x256xf32, #tpu.memory_space<vmem>>, vector<16x256xf32>,
    %14 = tpu.transpose %11, [1, 0] : vector<256x16xf32> -> vector<16x256xf32>
    %c16 = arith.constant 16 : index
    %c0_6 = arith.constant 0 : index
    %15 = vector.load %arg1[%c16, %c0_6] : memref<32x256xf32, #tpu.memory_space<vmem>>, vector<16x256xf32>
    tpu.vector_store %arg1[%c16, %c0_6], %14 {strides = array<i32>} : memref<32x256xf32, #tpu.memory_space<vmem>>, vector<16x256xf32>,
    return
  }
}

</mosaic_0001>

<llo_original>
// kernel: tpu_custom_call.1
$region0: #{tpu_custom_call.1}
  #allocation0 [shape = 'u32[]', space=smem, size = 0x4, offset = 0x4, fixed_abs, tag = 'smem constant byte address 0x4 - core index']
  #allocation1 [shape = 'u32[144,128]{1,0:T(1,128)}', space=vmem, size = 0x12000, scoped, tag = 'internal scratch']
  %s0 = inlined_call_operand.vmem [shape: f32[2,50,16], index: 0, kind: input, shape index: {}]
  %s1 = inlined_call_operand.hbm [shape: f32[32,256], index: 1, kind: output, shape index: {}]
  %s2 = sld [smem:[#allocation0]]
  $region14: #{tpu_custom_call.1} parent=0
    _
  %s4 = ssub.s32 1, %s2
  %s5 = scalar_select 0, %s4, %s2
  $region1: #{tpu_custom_call.1} parent=0
    #allocation2 [shape = 'u8[32768]{0}', space=vmem, size = 0x8000, scoped, tag = 'output window, operand 0, single buffered']
    #allocation3 [shape = 's32[1]{0}', space=sflag, size = 0x4, scoped, tag = 'scoped memory for tpu_custom_call.1']
    %6 = vsyncpa [#allocation3], 0
    // Predicated region
    $region2: #{tpu_custom_call.1} parent=1 // pred_check
      _
    $region3: #{tpu_custom_call.1} parent=1 // pred_check_branch
      %8 = sbr.rel (0) target = $region5
    $region4: #{tpu_custom_call.1} parent=1 // pred_region
      _
    $region5: #{tpu_custom_call.1} parent=1 // pred_fallthru
      _
    %v9 = vld [vmem:[%s0] sm:$0xff]
    %v10 = vld [vmem:[%s0 + $0x8] sm:$0xff]
    %s11 = scalar_lea.vmem %s0, 56
    %v12 = vld [vmem:[%s11] sm:$0xff]
    %v13 = vld [vmem:[%s11 + $0x8] sm:$0xff]
    %v16 = vcombine.high %v12, %v12
    %v18 = vunpack.c.l.s4 1966171168
    %v19 = vunpack.c.0.s8 %v18
    %v20 = vlaneseq
    %v21 = vshrl.u32 %v20, 7
    %v22 = vsub.s32 %v19, %v21
    %v23 = vrot.slane %v12, %v22
    %v25 = vunpack.c.l.s4 1966171168
    %v26 = vunpack.c.0.s8 %v25
    %v27 = vlaneseq
    %v28 = vshrl.u32 %v27, 7
    %v29 = vsub.s32 %v26, %v28
    %v30 = vrot.slane %v16, %v29
    %v31 = vcombine.high %v23, %v23
    %v32 = vcombine.high %v30, %v30
    %v34 = vunpack.c.l.s4 1966171168
    %v35 = vunpack.c.0.s8 %v34
    %v36 = vlaneseq
    %v37 = vshrl.u32 %v36, 7
    %v38 = vsub.s32 %v35, %v37
    %v39 = vrot.slane %v23, %v38
    %v41 = vunpack.c.l.s4 1966171168
    %v42 = vunpack.c.0.s8 %v41
    %v43 = vlaneseq
    %v44 = vshrl.u32 %v43, 7
    %v45 = vsub.s32 %v42, %v44
    %v46 = vrot.slane %v30, %v45
    %v48 = vunpack.c.l.s4 1966171168
    %v49 = vunpack.c.0.s8 %v48
    %v50 = vlaneseq
    %v51 = vshrl.u32 %v50, 7
    %v52 = vsub.s32 %v49, %v51
    %v53 = vrot.slane %v31, %v52
    %v55 = vunpack.c.l.s4 1966171168
    %v56 = vunpack.c.0.s8 %v55
    %v57 = vlaneseq
    %v58 = vshrl.u32 %v57, 7
    %v59 = vsub.s32 %v56, %v58
    %v60 = vrot.slane %v32, %v59
    %v61 = vcombine.high %v39, %v39
    %v62 = vcombine.high %v46, %v46
    %v63 = vcombine.high %v53, %v53
    %v64 = vcombine.high %v60, %v60
    %v65 = vcombine.high %v13, %v13
    %v67 = vunpack.c.l.s4 1966171168
    %v68 = vunpack.c.0.s8 %v67
    %v69 = vlaneseq
    %v70 = vshrl.u32 %v69, 7
    %v71 = vsub.s32 %v68, %v70
    %v72 = vrot.slane %v13, %v71
    %v74 = vunpack.c.l.s4 1966171168
    %v75 = vunpack.c.0.s8 %v74
    %v76 = vlaneseq
    %v77 = vshrl.u32 %v76, 7
    %v78 = vsub.s32 %v75, %v77
    %v79 = vrot.slane %v65, %v78
    %v80 = vcombine.high %v72, %v72
    %v81 = vcombine.high %v79, %v79
    %v83 = vunpack.c.l.s4 1966171168
    %v84 = vunpack.c.0.s8 %v83
    %v85 = vlaneseq
    %v86 = vshrl.u32 %v85, 7
    %v87 = vsub.s32 %v84, %v86
    %v88 = vrot.slane %v72, %v87
    %v90 = vunpack.c.l.s4 1966171168
    %v91 = vunpack.c.0.s8 %v90
    %v92 = vlaneseq
    %v93 = vshrl.u32 %v92, 7
    %v94 = vsub.s32 %v91, %v93
    %v95 = vrot.slane %v79, %v94
    %v97 = vunpack.c.l.s4 1966171168
    %v98 = vunpack.c.0.s8 %v97
    %v99 = vlaneseq
    %v100 = vshrl.u32 %v99, 7
    %v101 = vsub.s32 %v98, %v100
    %v102 = vrot.slane %v80, %v101
    %v104 = vunpack.c.l.s4 1966171168
    %v105 = vunpack.c.0.s8 %v104
    %v106 = vlaneseq
    %v107 = vshrl.u32 %v106, 7
    %v108 = vsub.s32 %v105, %v107
    %v109 = vrot.slane %v81, %v108
    %v110 = vcombine.high %v88, %v88
    %v111 = vcombine.high %v95, %v95
    %v112 = vcombine.high %v102, %v102
    %v113 = vcombine.high %v109, %v109
    %v114 = vlaneseq
    %v115 = vshrl.u32 %v114, 7
    %v116 = vsub.s32 0, %v115
    %v117 = vrot.slane %v39, %v116
    %v118 = vlaneseq
    %v119 = vshrl.u32 %v118, 7
    %v120 = vsub.s32 0, %v119
    %v121 = vrot.slane %v53, %v120
    %v122 = vlaneseq
    %v123 = vshrl.u32 %v122, 7
    %v124 = vsub.s32 0, %v123
    %v125 = vrot.slane %v61, %v124
    %v126 = vlaneseq
    %v127 = vshrl.u32 %v126, 7
    %v128 = vsub.s32 0, %v127
    %v129 = vrot.slane %v63, %v128
    %v130 = vlaneseq
    %v131 = vshrl.u32 %v130, 7
    %v132 = vsub.s32 0, %v131
    %v133 = vrot.slane %v46, %v132
    %v134 = vlaneseq
    %v135 = vshrl.u32 %v134, 7
    %v136 = vsub.s32 0, %v135
    %v137 = vrot.slane %v60, %v136
    %v138 = vlaneseq
    %v139 = vshrl.u32 %v138, 7
    %v140 = vsub.s32 0, %v139
    %v141 = vrot.slane %v62, %v140
    %v142 = vlaneseq
    %v143 = vshrl.u32 %v142, 7
    %v144 = vsub.s32 0, %v143
    %v145 = vrot.slane %v64, %v144
    %v146 = vlaneseq
    %v147 = vshrl.u32 %v146, 7
    %v148 = vsub.s32 0, %v147
    %v149 = vrot.slane %v88, %v148
    %v150 = vlaneseq
    %v151 = vshrl.u32 %v150, 7
    %v152 = vsub.s32 0, %v151
    %v153 = vrot.slane %v102, %v152
    %v154 = vlaneseq
    %v155 = vshrl.u32 %v154, 7
    %v156 = vsub.s32 0, %v155
    %v157 = vrot.slane %v110, %v156
    %v158 = vlaneseq
    %v159 = vshrl.u32 %v158, 7
    %v160 = vsub.s32 0, %v159
    %v161 = vrot.slane %v112, %v160
    %v162 = vlaneseq
    %v163 = vshrl.u32 %v162, 7
    %v164 = vsub.s32 0, %v163
    %v165 = vrot.slane %v95, %v164
    %v166 = vlaneseq
    %v167 = vshrl.u32 %v166, 7
    %v168 = vsub.s32 0, %v167
    %v169 = vrot.slane %v109, %v168
    %v170 = vlaneseq
    %v171 = vshrl.u32 %v170, 7
    %v172 = vsub.s32 0, %v171
    %v173 = vrot.slane %v111, %v172
    %v174 = vlaneseq
    %v175 = vshrl.u32 %v174, 7
    %v176 = vsub.s32 0, %v175
    %v177 = vrot.slane %v113, %v176
    %194 = vxpose.xlu0.b32.start [1/16] %v9, 128
    %195 = vxpose.xlu0.b32.cont [2/16] %v10, 128
    %196 = vxpose.xlu0.b32.cont [3/16] %v9, 128
    %197 = vxpose.xlu0.b32.cont [4/16] %v10, 128
    %198 = vxpose.xlu0.b32.cont [5/16] %v9, 128
    %199 = vxpose.xlu0.b32.cont [6/16] %v10, 128
    %200 = vxpose.xlu0.b32.cont [7/16] %v9, 128
    %201 = vxpose.xlu0.b32.cont [8/16] %v10, 128
    %202 = vxpose.xlu0.b32.cont [9/16] %v9, 128
    %203 = vxpose.xlu0.b32.cont [10/16] %v10, 128
    %204 = vxpose.xlu0.b32.cont [11/16] %v9, 128
    %205 = vxpose.xlu0.b32.cont [12/16] %v10, 128
    %206 = vxpose.xlu0.b32.cont [13/16] %v9, 128
    %207 = vxpose.xlu0.b32.cont [14/16] %v10, 128
    %208 = vxpose.xlu0.b32.cont [15/16] %v9, 128
    %209 = vxpose.xlu0.b32.end [16/16] %v10, 128
    %v210 = vpop.trf.xlu0
    %v211 = vpop.trf.xlu0
    %v212 = vpop.trf.xlu0
    %v213 = vpop.trf.xlu0
    %v214 = vpop.trf.xlu0
    %v215 = vpop.trf.xlu0
    %v216 = vpop.trf.xlu0
    %v217 = vpop.trf.xlu0
    %v218 = vpop.trf.xlu0
    %v219 = vpop.trf.xlu0
    %v220 = vpop.trf.xlu0
    %v221 = vpop.trf.xlu0
    %v222 = vpop.trf.xlu0
    %v223 = vpop.trf.xlu0
    %v224 = vpop.trf.xlu0
    %v225 = vpop.trf.xlu0
    %226 = vst [vmem:[#allocation2] sm:$0xff] %v210
    %227 = vst [vmem:[#allocation2 + $0x8] sm:$0xff] %v210
    %228 = vst [vmem:[#allocation2 + $0x10] sm:$0xff] %v211
    %229 = vst [vmem:[#allocation2 + $0x18] sm:$0xff] %v211
    %230 = vxpose.xlu0.b32.start [1/16] %v117, 128
    %231 = vxpose.xlu0.b32.cont [2/16] %v117, 128
    %232 = vxpose.xlu0.b32.cont [3/16] %v121, 128
    %233 = vxpose.xlu0.b32.cont [4/16] %v121, 128
    %234 = vxpose.xlu0.b32.cont [5/16] %v125, 128
    %235 = vxpose.xlu0.b32.cont [6/16] %v125, 128
    %236 = vxpose.xlu0.b32.cont [7/16] %v129, 128
    %237 = vxpose.xlu0.b32.cont [8/16] %v129, 128
    %238 = vxpose.xlu0.b32.cont [9/16] %v133, 128
    %239 = vxpose.xlu0.b32.cont [10/16] %v133, 128
    %240 = vxpose.xlu0.b32.cont [11/16] %v137, 128
    %241 = vxpose.xlu0.b32.cont [12/16] %v137, 128
    %242 = vxpose.xlu0.b32.cont [13/16] %v141, 128
    %243 = vxpose.xlu0.b32.cont [14/16] %v141, 128
    %244 = vxpose.xlu0.b32.cont [15/16] %v145, 128
    %245 = vxpose.xlu0.b32.end [16/16] %v145, 128
    %v246 = vpop.trf.xlu0
    %v247 = vpop.trf.xlu0
    %v248 = vpop.trf.xlu0
    %v249 = vpop.trf.xlu0
    %v250 = vpop.trf.xlu0
    %v251 = vpop.trf.xlu0
    %v252 = vpop.trf.xlu0
    %v253 = vpop.trf.xlu0
    %v254 = vpop.trf.xlu0
    %v255 = vpop.trf.xlu0
    %v256 = vpop.trf.xlu0
    %v257 = vpop.trf.xlu0
    %v258 = vpop.trf.xlu0
    %v259 = vpop.trf.xlu0
    %v260 = vpop.trf.xlu0
    %v261 = vpop.trf.xlu0
    %262 = vxpose.xlu0.b32.start [1/16] %v149, 128
    %263 = vxpose.xlu0.b32.cont [2/16] %v149, 128
    %264 = vxpose.xlu0.b32.cont [3/16] %v153, 128
    %265 = vxpose.xlu0.b32.cont [4/16] %v153, 128
    %266 = vxpose.xlu0.b32.cont [5/16] %v157, 128
    %267 = vxpose.xlu0.b32.cont [6/16] %v157, 128
    %268 = vxpose.xlu0.b32.cont [7/16] %v161, 128
    %269 = vxpose.xlu0.b32.cont [8/16] %v161, 128
    %270 = vxpose.xlu0.b32.cont [9/16] %v165, 128
    %271 = vxpose.xlu0.b32.cont [10/16] %v165, 128
    %272 = vxpose.xlu0.b32.cont [11/16] %v169, 128
    %273 = vxpose.xlu0.b32.cont [12/16] %v169, 128
    %274 = vxpose.xlu0.b32.cont [13/16] %v173, 128
    %275 = vxpose.xlu0.b32.cont [14/16] %v173, 128
    %276 = vxpose.xlu0.b32.cont [15/16] %v177, 128
    %277 = vxpose.xlu0.b32.end [16/16] %v177, 128
    %v278 = vpop.trf.xlu0
    %v279 = vpop.trf.xlu0
    %v280 = vpop.trf.xlu0
    %v281 = vpop.trf.xlu0
    %v282 = vpop.trf.xlu0
    %v283 = vpop.trf.xlu0
    %v284 = vpop.trf.xlu0
    %v285 = vpop.trf.xlu0
    %v286 = vpop.trf.xlu0
    %v287 = vpop.trf.xlu0
    %v288 = vpop.trf.xlu0
    %v289 = vpop.trf.xlu0
    %v290 = vpop.trf.xlu0
    %v291 = vpop.trf.xlu0
    %v292 = vpop.trf.xlu0
    %v293 = vpop.trf.xlu0
    %294 = vst [vmem:[#allocation2 + $0x20] sm:$0xff] %v246
    %295 = vst [vmem:[#allocation2 + $0x28] sm:$0xff] %v278
    %296 = vst [vmem:[#allocation2 + $0x30] sm:$0xff] %v247
    %297 = vst [vmem:[#allocation2 + $0x38] sm:$0xff] %v279
    // Predicated region
    $region6: #{tpu_custom_call.1} parent=1 // pred_check
      _
    $region7: #{tpu_custom_call.1} parent=1 // pred_check_branch
      %299 = sbr.rel (0) target = $region9
    $region8: #{tpu_custom_call.1} parent=1 // pred_region
      %s301 = ssub.s32 1024, 1024
      %302 = vsyncadd [#allocation3], %s301
      %s303 = sshll.u32 [#allocation2], 4
      %s304 = int_to_ptr.vmem [resolvable:$true] %s303
      %309 = dma.vmem_to_hbm [thread:$0]  %s304, 1024, %s1, [#allocation3], 256, 256, 16
    $region9: #{tpu_custom_call.1} parent=1 // pred_fallthru
      _
    // Predicated region
    $region10: #{tpu_custom_call.1} parent=1 // pred_check
      _
    $region11: #{tpu_custom_call.1} parent=1 // pred_check_branch
      %311 = sbr.rel (0) target = $region13
    $region12: #{tpu_custom_call.1} parent=1 // pred_region
      %312 = dma.done [#allocation3], 1024
    $region13: #{tpu_custom_call.1} parent=1 // pred_fallthru
      _
    %313 = vsyncpa [#allocation3], 1

</llo_original>
